<compile_context>
chip_gen: v6e
topology: v6e:2x2x1
jax: 0.10.0
libtpu: 0.0.40
codegen_flags: <defaults>
</compile_context>

<pallas_src>
import jax
import jax.numpy as jnp
from jax.experimental import pallas as pl
from jax.experimental.pallas import tpu as pltpu

BN_EPS = 1e-5

# TODO(synk): BatchNorm2d is implemented in inference mode (running stats);
#             PyTorch train-mode batch statistics are not reproduced.
# TODO(synk): grouped convolution (groups>1) not implemented; example uses groups=1.
# TODO(synk): im2col patches are still materialised in HBM (KH*KW duplication,
#             halved by bf16); full dedup would need in-kernel strided DMA gather.


# ----------------------------------------------------------------------------
# Pallas kernel: single matmul + folded BN + residual + per-channel ReLU
# ----------------------------------------------------------------------------
def _make_conv_bn_kernel(has_res):
    def kernel(xp_ref, w_ref, scale_ref, shift_ref, rmask_ref, *rest):
        if has_res:
            res_ref, o_ref = rest
        else:
            (o_ref,) = rest
        # One MXU matmul: taps folded into the contraction dim (bf16 in, f32 acc).
        y = jnp.dot(xp_ref[...], w_ref[...], preferred_element_type=jnp.float32)
        y = y * scale_ref[...] + shift_ref[...]          # folded BatchNorm (eval)
        if has_res:
            y = y + res_ref[...]
        y = jnp.where(rmask_ref[...] > 0.5, jnp.maximum(y, 0.0), y)  # selective ReLU
        o_ref[...] = y.astype(o_ref.dtype)
    return kernel


def conv_bn(x_nhwc, w_oihw, gamma, beta, mean, var, *,
            stride, padding, relu_mask, residual_nhwc=None):
    """Conv2d(bias=False) + BatchNorm2d(eval) [+ residual] [+ per-channel ReLU]."""
    N, H, W, Cin = x_nhwc.shape
    Ct, Cin_w, KH, KW = w_oihw.shape
    assert Cin == Cin_w, "groups != 1 not supported"
    Ho = (H + 2 * padding - KH) // stride + 1
    Wo = (W + 2 * padding - KW) // stride + 1
    M = N * Ho * Wo
    K = KH * KW * Cin

    # --- glue: im2col with taps folded into the contraction dim --------------
    xp = jnp.pad(x_nhwc, ((0, 0), (padding, padding), (padding, padding), (0, 0)))
    cols = []
    for kh in range(KH):
        for kw in range(KW):
            win = jax.lax.slice(
                xp,
                (0, kh, kw, 0),
                (N, kh + (Ho - 1) * stride + 1, kw + (Wo - 1) * stride + 1, Cin),
                (1, stride, stride, 1))
            cols.append(win.reshape(M, Cin))
    patches = jnp.concatenate(cols, axis=1)                        # (M, K)
    w_flat = jnp.transpose(w_oihw, (2, 3, 1, 0)).reshape(K, Ct)    # (K, Ct)

    inv_std = 1.0 / jnp.sqrt(var + BN_EPS)
    scale = (gamma * inv_std).astype(jnp.float32)                  # (Ct,)
    shift = (beta - mean * gamma * inv_std).astype(jnp.float32)    # (Ct,)
    rmask = relu_mask.astype(jnp.float32)                          # (Ct,)

    # --- lane-dense pixel packing: P output pixels per row -> last dim = 128 -
    if Ct < 128 and 128 % Ct == 0 and M % (128 // Ct) == 0:
        P = 128 // Ct
    else:
        P = 1
    Mp, Kp, Ctp = M // P, P * K, P * Ct

    patches_p = patches.reshape(Mp, Kp).astype(jnp.bfloat16)       # free reshape
    w_bd = jnp.kron(jnp.eye(P, dtype=jnp.float32),
                    w_flat.astype(jnp.float32)).astype(jnp.bfloat16)  # (Kp, Ctp)
    scale_p = jnp.tile(scale, P).reshape(1, Ctp)
    shift_p = jnp.tile(shift, P).reshape(1, Ctp)
    rmask_p = jnp.tile(rmask, P).reshape(1, Ctp)

    has_res = residual_nhwc is not None
    args = [patches_p, w_bd, scale_p, shift_p, rmask_p]
    if has_res:
        args.append(residual_nhwc.reshape(Mp, Ctp).astype(jnp.float32))

    # --- grid over packed pixel rows (small blocks keep v7x's 64 MiB happy) --
    TM = Mp if Mp <= 256 else 256          # 256 is a multiple of 16 (bf16 tile)
    grid = (pl.cdiv(Mp, TM),)

    row_spec = pl.BlockSpec((TM, Kp), lambda i: (i, 0))
    vec_spec = pl.BlockSpec((1, Ctp), lambda i: (0, 0))
    in_specs = [row_spec,
                pl.BlockSpec((Kp, Ctp), lambda i: (0, 0)),   # weights resident
                vec_spec, vec_spec, vec_spec]
    if has_res:
        in_specs.append(pl.BlockSpec((TM, Ctp), lambda i: (i, 0)))
    out_spec = pl.BlockSpec((TM, Ctp), lambda i: (i, 0))

    out = pl.pallas_call(
        _make_conv_bn_kernel(has_res),
        out_shape=jax.ShapeDtypeStruct((Mp, Ctp), jnp.float32),
        grid=grid,
        in_specs=in_specs,
        out_specs=out_spec,
        compiler_params=pltpu.CompilerParams(
            dimension_semantics=("parallel",)),   # megacore sharding on v7x
    )(*args)
    return out.reshape(M, Ct).reshape(N, Ho, Wo, Ct)


# ----------------------------------------------------------------------------
# Pure-JAX reference (independent path, for correctness checking only)
# ----------------------------------------------------------------------------
def conv_bn_ref(x_nhwc, w_oihw, gamma, beta, mean, var, *,
                stride, padding, relu_mask, residual_nhwc=None):
    y = jax.lax.conv_general_dilated(
        x_nhwc, w_oihw, (stride, stride),
        ((padding, padding), (padding, padding)),
        dimension_numbers=("NHWC", "OIHW", "NHWC"))
    y = (y - mean) / jnp.sqrt(var + BN_EPS) * gamma + beta
    if residual_nhwc is not None:
        y = y + residual_nhwc
    y = jnp.where(relu_mask > 0.5, jnp.maximum(y, 0.0), y)
    return y


# ----------------------------------------------------------------------------
# BasicBlock / Encoder forward (structure mirrors the PyTorch module)
# ----------------------------------------------------------------------------
def basic_block_forward(x, p, conv_fn, *, kernel_size, stride, padding, fuse):
    Cout = p["w1"].shape[0]
    relu_on = jnp.ones((Cout,), jnp.float32)
    relu_off = jnp.zeros((Cout,), jnp.float32)

    if stride > 1:
        if fuse and 2 * padding + 1 == kernel_size:
            # Fuse conv1 (kxk, stride s, pad (k-1)/2) with the 1x1 downsample
            # (stride s, pad 0): embed the 1x1 weight at the centre tap and
            # concatenate along Cout -> one shared im2col + one matmul.
            Cin = p["w1"].shape[1]
            wd_emb = jnp.zeros((Cout, Cin, kernel_size, kernel_size),
                               p["wd"].dtype)
            wd_emb = wd_emb.at[:, :, padding, padding].set(p["wd"][:, :, 0, 0])
            w_cat = jnp.concatenate([p["w1"], wd_emb], axis=0)
            g_cat = jnp.concatenate([p["g1"], p["gd"]])
            b_cat = jnp.concatenate([p["b1"], p["bd"]])
            m_cat = jnp.concatenate([p["m1"], p["md"]])
            v_cat = jnp.concatenate([p["v1"], p["vd"]])
            rmask = jnp.concatenate([relu_on, relu_off])  # ReLU only on conv1 half
            y = conv_fn(x, w_cat, g_cat, b_cat, m_cat, v_cat,
                        stride=stride, padding=padding, relu_mask=rmask)
            out = y[..., :Cout]
            residual = y[..., Cout:]
        else:
            out = conv_fn(x, p["w1"], p["g1"], p["b1"], p["m1"], p["v1"],
                          stride=stride, padding=padding, relu_mask=relu_on)
            residual = conv_fn(x, p["wd"], p["gd"], p["bd"], p["md"], p["vd"],
                               stride=stride, padding=0, relu_mask=relu_off)
    else:
        out = conv_fn(x, p["w1"], p["g1"], p["b1"], p["m1"], p["v1"],
                      stride=stride, padding=padding, relu_mask=relu_on)
        residual = x

    out = conv_fn(out, p["w2"], p["g2"], p["b2"], p["m2"], p["v2"],
                  stride=1, padding=padding, relu_mask=relu_on,
                  residual_nhwc=residual)
    return out


def encoder_forward(x, params, conv_fn, *, kernel_size, stride, padding, fuse):
    x = basic_block_forward(x, params["block1"], conv_fn,
                            kernel_size=kernel_size, stride=stride,
                            padding=padding, fuse=fuse)
    x = basic_block_forward(x, params["block2"], conv_fn,
                            kernel_size=kernel_size, stride=1,
                            padding=padding, fuse=fuse)
    return x


# ----------------------------------------------------------------------------
# Deterministic parameter init (shapes follow the PyTorch __init__)
# ----------------------------------------------------------------------------
def _init_bn(key, c):
    k1, k2, k3, k4 = jax.random.split(key, 4)
    gamma = jax.random.uniform(k1, (c,), jnp.float32, 0.5, 1.5)
    beta = 0.1 * jax.random.normal(k2, (c,), jnp.float32)
    mean = 0.1 * jax.random.normal(k3, (c,), jnp.float32)
    var = jax.random.uniform(k4, (c,), jnp.float32, 0.5, 1.5)
    return gamma, beta, mean, var


def _init_basic_block(key, cin, cout, k, stride):
    keys = jax.random.split(key, 6)
    p = {}
    p["w1"] = 0.1 * jax.random.normal(keys[0], (cout, cin, k, k), jnp.float32)
    p["g1"], p["b1"], p["m1"], p["v1"] = _init_bn(keys[1], cout)
    p["w2"] = 0.1 * jax.random.normal(keys[2], (cout, cout, k, k), jnp.float32)
    p["g2"], p["b2"], p["m2"], p["v2"] = _init_bn(keys[3], cout)
    if stride > 1:
        p["wd"] = 0.1 * jax.random.normal(keys[4], (cout, cin, 1, 1), jnp.float32)
        p["gd"], p["bd"], p["md"], p["vd"] = _init_bn(keys[5], cout)
    return p


def init_encoder(key, in_planes, out_planes, kernel_size, stride):
    k1, k2 = jax.random.split(key, 2)
    return {
        "block1": _init_basic_block(k1, in_planes, out_planes, kernel_size, stride),
        "block2": _init_basic_block(k2, out_planes, out_planes, kernel_size, 1),
    }


# ----------------------------------------------------------------------------
if __name__ == "__main__":
    # Encoder(in_planes=4, out_planes=8, kernel_size=3, stride=2, padding=1)
    in_planes, out_planes, kernel_size, stride, padding = 4, 8, 3, 2, 1
    N, H, W = 2, 16, 16

    key = jax.random.PRNGKey(0)
    kx, kp = jax.random.split(key)
    x_nchw = jax.random.normal(kx, (N, in_planes, H, W), jnp.float32)  # PyTorch NCHW
    params = init_encoder(kp, in_planes, out_planes, kernel_size, stride)

    x_nhwc = jnp.transpose(x_nchw, (0, 2, 3, 1))

    # Pallas path (fused conv1+downsample, packed lane-dense layout).
    out_nhwc = encoder_forward(x_nhwc, params, conv_bn,
                               kernel_size=kernel_size, stride=stride,
                               padding=padding, fuse=True)
    out_nchw = jnp.transpose(out_nhwc, (0, 3, 1, 2))
    jax.block_until_ready(out_nchw)

    # Independent pure-JAX reference (unfused structure, f32 end to end).
    ref_nhwc = encoder_forward(x_nhwc, params, conv_bn_ref,
                               kernel_size=kernel_size, stride=stride,
                               padding=padding, fuse=False)
    ref_nchw = jnp.transpose(ref_nhwc, (0, 3, 1, 2))

    assert out_nchw.shape == (N, out_planes, H // stride, W // stride), out_nchw.shape
    if not jnp.allclose(out_nchw, ref_nchw, rtol=5e-2, atol=5e-2):
        max_err = float(jnp.max(jnp.abs(out_nchw - ref_nchw)))
        raise AssertionError(f"Pallas output mismatch, max abs err = {max_err}")

    print("KERNEL_OK")
</pallas_src>

<mosaic_0001>
module attributes {stable_mosaic.version = 11 : i64} {
  func.func @kernel(%arg0: i32, %arg1: memref<16x288xbf16, #tpu.memory_space<vmem>>, %arg2: memref<288x128xbf16, #tpu.memory_space<vmem>>, %arg3: memref<1x128xf32, #tpu.memory_space<vmem>>, %arg4: memref<1x128xf32, #tpu.memory_space<vmem>>, %arg5: memref<1x128xf32, #tpu.memory_space<vmem>>, %arg6: memref<16x128xf32, #tpu.memory_space<vmem>>) attributes {dimension_semantics = [#tpu.dimension_semantics<parallel>], iteration_bounds = array<i64: 1>, scalar_prefetch = 0 : i64, scratch_operands = 0 : i64, tpu.core_type = #tpu.core_type<tc>, window_params = [{transform_indices = @transform_0, window_bounds = array<i64: 16, 288>}, {pipeline_mode = #tpu.pipeline_mode<synchronous>, transform_indices = @transform_1, window_bounds = array<i64: 288, 128>}, {pipeline_mode = #tpu.pipeline_mode<synchronous>, transform_indices = @transform_2, window_bounds = array<i64: 1, 128>}, {pipeline_mode = #tpu.pipeline_mode<synchronous>, transform_indices = @transform_3, window_bounds = array<i64: 1, 128>}, {pipeline_mode = #tpu.pipeline_mode<synchronous>, transform_indices = @transform_4, window_bounds = array<i64: 1, 128>}, {transform_indices = @transform_5, window_bounds = array<i64: 16, 128>}]} {
    %c0 = arith.constant 0 : index
    %c0_0 = arith.constant 0 : index
    %0 = vector.load %arg1[%c0, %c0_0] : memref<16x288xbf16, #tpu.memory_space<vmem>>, vector<16x288xbf16>
    %c0_1 = arith.constant 0 : index
    %c0_2 = arith.constant 0 : index
    %1 = vector.load %arg2[%c0_1, %c0_2] : memref<288x128xbf16, #tpu.memory_space<vmem>>, vector<288x128xbf16>
    %cst = arith.constant dense<0.000000e+00> : vector<16x128xf32>
    %2 = tpu.matmul %0, %1, %cst {dimension_numbers = #tpu.dot_dimension_numbers<[1], [0], [0], [1], [0, 0, 1, 1], [], []>} : vector<16x288xbf16>, vector<288x128xbf16>, vector<16x128xf32> -> vector<16x128xf32>
    %c0_3 = arith.constant 0 : index
    %c0_4 = arith.constant 0 : index
    %3 = vector.load %arg3[%c0_3, %c0_4] : memref<1x128xf32, #tpu.memory_space<vmem>>, vector<1x128xf32>
    %4 = vector.broadcast %3 : vector<1x128xf32> to vector<16x128xf32>
    %5 = arith.mulf %2, %4 : vector<16x128xf32>
    %c0_5 = arith.constant 0 : index
    %c0_6 = arith.constant 0 : index
    %6 = vector.load %arg4[%c0_5, %c0_6] : memref<1x128xf32, #tpu.memory_space<vmem>>, vector<1x128xf32>
    %7 = vector.broadcast %6 : vector<1x128xf32> to vector<16x128xf32>
    %8 = arith.addf %5, %7 : vector<16x128xf32>
    %c0_7 = arith.constant 0 : index
    %c0_8 = arith.constant 0 : index
    %9 = vector.load %arg5[%c0_7, %c0_8] : memref<1x128xf32, #tpu.memory_space<vmem>>, vector<1x128xf32>
    %cst_9 = arith.constant 5.000000e-01 : f32
    %10 = vector.broadcast %cst_9 : f32 to vector<1x128xf32>
    %11 = arith.cmpf ogt, %9, %10 : vector<1x128xf32>
    %cst_10 = arith.constant 0.000000e+00 : f32
    %12 = vector.broadcast %cst_10 : f32 to vector<16x128xf32>
    %13 = arith.maximumf %8, %12 : vector<16x128xf32>
    %14 = vector.shape_cast %11 : vector<1x128xi1> to vector<1x128xi1>
    %15 = vector.broadcast %14 : vector<1x128xi1> to vector<16x128xi1>
    %16 = arith.select %15, %13, %8 : vector<16x128xi1>, vector<16x128xf32>
    %c0_11 = arith.constant 0 : index
    %c0_12 = arith.constant 0 : index
    %17 = vector.load %arg6[%c0_11, %c0_12] : memref<16x128xf32, #tpu.memory_space<vmem>>, vector<16x128xf32>
    tpu.vector_store %arg6[%c0_11, %c0_12], %16 {strides = array<i32>} : memref<16x128xf32, #tpu.memory_space<vmem>>, vector<16x128xf32>,
    return
  }
  func.func @transform_0(%arg0: i32) -> (i32, i32) {
    %c0_i32 = arith.constant 0 : i32
    %c0_i32_0 = arith.constant 0 : i32
    return %arg0, %c0_i32 : i32, i32
  }
  func.func @transform_1(%arg0: i32) -> (i32, i32) {
    %c0_i32 = arith.constant 0 : i32
    %c0_i32_0 = arith.constant 0 : i32
    %c0_i32_1 = arith.constant 0 : i32
    return %c0_i32, %c0_i32_0 : i32, i32
  }
  func.func @transform_2(%arg0: i32) -> (i32, i32) {
    %c0_i32 = arith.constant 0 : i32
    %c0_i32_0 = arith.constant 0 : i32
    %c0_i32_1 = arith.constant 0 : i32
    return %c0_i32, %c0_i32_0 : i32, i32
  }
  func.func @transform_3(%arg0: i32) -> (i32, i32) {
    %c0_i32 = arith.constant 0 : i32
    %c0_i32_0 = arith.constant 0 : i32
    %c0_i32_1 = arith.constant 0 : i32
    return %c0_i32, %c0_i32_0 : i32, i32
  }
  func.func @transform_4(%arg0: i32) -> (i32, i32) {
    %c0_i32 = arith.constant 0 : i32
    %c0_i32_0 = arith.constant 0 : i32
    %c0_i32_1 = arith.constant 0 : i32
    return %c0_i32, %c0_i32_0 : i32, i32
  }
  func.func @transform_5(%arg0: i32) -> (i32, i32) {
    %c0_i32 = arith.constant 0 : i32
    %c0_i32_0 = arith.constant 0 : i32
    return %arg0, %c0_i32 : i32, i32
  }
}

</mosaic_0001>

<llo_original>
// kernel: tpu_custom_call.1
$region0: #{tpu_custom_call.1}
  #allocation0 [shape = 'u32[]', space=smem, size = 0x4, offset = 0x4, fixed_abs, tag = 'smem constant byte address 0x4 - core index']
  #allocation1 [shape = 'u32[144,128]{1,0:T(1,128)}', space=vmem, size = 0x12000, scoped, tag = 'internal scratch']
  %s0 = inlined_call_operand.hbm [shape: bf16[16,288], index: 0, kind: input, shape index: {}]
  %s1 = inlined_call_operand.hbm [shape: bf16[288,128], index: 1, kind: input, shape index: {}]
  %s2 = inlined_call_operand.vmem [shape: f32[1,128], index: 2, kind: input, shape index: {}]
  %s3 = inlined_call_operand.vmem [shape: f32[1,128], index: 3, kind: input, shape index: {}]
  %s4 = inlined_call_operand.vmem [shape: f32[1,128], index: 4, kind: input, shape index: {}]
  %s5 = inlined_call_operand.hbm [shape: f32[16,128], index: 5, kind: output, shape index: {}]
  %s6 = sld [smem:[#allocation0]]
  $region38: #{tpu_custom_call.1} parent=0
    _
  %s8 = ssub.s32 1, %s6
  %s9 = scalar_select 0, %s8, %s6
  $region1: #{tpu_custom_call.1} parent=0
    #allocation2 [shape = 'u8[12288]{0}', space=vmem, size = 0x3000, scoped, tag = 'input window, operand 0, single buffered']
    #allocation3 [shape = 's32[1]{0}', space=sflag, size = 0x4, scoped, tag = 'scoped memory for tpu_custom_call.1']
    #allocation4 [shape = 's32[1]{0}', space=sflag, size = 0x4, scoped, tag = 'scoped memory for tpu_custom_call.1']
    #allocation5 [shape = 'u8[73728]{0}', space=vmem, size = 0x12000, scoped, tag = 'input window, operand 1, single buffered']
    #allocation6 [shape = 's32[1]{0}', space=sflag, size = 0x4, scoped, tag = 'scoped memory for tpu_custom_call.1']
    #allocation7 [shape = 'u8[8192]{0}', space=vmem, size = 0x2000, scoped, tag = 'output window, operand 0, single buffered']
    %10 = vsyncpa [#allocation3], 0
    %11 = vsyncpa [#allocation6], 0
    %12 = vsyncpa [#allocation4], 0
    // Predicated region
    $region2: #{tpu_custom_call.1} parent=1 // pred_check
      _
    $region3: #{tpu_custom_call.1} parent=1 // pred_check_branch
      %14 = sbr.rel (0) target = $region5
    $region4: #{tpu_custom_call.1} parent=1 // pred_region
      %s16 = ssub.s32 384, 384
      %17 = vsyncadd [#allocation3], %s16
      %s18 = sshll.u32 [#allocation2], 4
      %s19 = int_to_ptr.vmem [resolvable:$true] %s18
      %24 = dma.hbm_to_vmem [thread:$0]  %s0, 384, %s19, [#allocation3], 192, 192, 12
    $region5: #{tpu_custom_call.1} parent=1 // pred_fallthru
      _
    // Predicated region
    $region6: #{tpu_custom_call.1} parent=1 // pred_check
      _
    $region7: #{tpu_custom_call.1} parent=1 // pred_check_branch
      %26 = sbr.rel (0) target = $region9
    $region8: #{tpu_custom_call.1} parent=1 // pred_region
      %s28 = ssub.s32 2304, 2304
      %29 = vsyncadd [#allocation6], %s28
      %s30 = sshll.u32 [#allocation5], 4
      %s31 = int_to_ptr.vmem [resolvable:$true] %s30
      %36 = dma.hbm_to_vmem [thread:$0]  %s1, 2304, %s31, [#allocation6], 64, 64, 4
    $region9: #{tpu_custom_call.1} parent=1 // pred_fallthru
      _
    // Predicated region
    $region10: #{tpu_custom_call.1} parent=1 // pred_check
      _
    $region11: #{tpu_custom_call.1} parent=1 // pred_check_branch
      %38 = sbr.rel (0) target = $region13
    $region12: #{tpu_custom_call.1} parent=1 // pred_region
      _
    $region13: #{tpu_custom_call.1} parent=1 // pred_fallthru
      _
    // Predicated region
    $region14: #{tpu_custom_call.1} parent=1 // pred_check
      _
    $region15: #{tpu_custom_call.1} parent=1 // pred_check_branch
      %40 = sbr.rel (0) target = $region17
    $region16: #{tpu_custom_call.1} parent=1 // pred_region
      _
    $region17: #{tpu_custom_call.1} parent=1 // pred_fallthru
      _
    // Predicated region
    $region18: #{tpu_custom_call.1} parent=1 // pred_check
      _
    $region19: #{tpu_custom_call.1} parent=1 // pred_check_branch
      %42 = sbr.rel (0) target = $region21
    $region20: #{tpu_custom_call.1} parent=1 // pred_region
      _
    $region21: #{tpu_custom_call.1} parent=1 // pred_fallthru
      _
    // Predicated region
    $region22: #{tpu_custom_call.1} parent=1 // pred_check
      _
    $region23: #{tpu_custom_call.1} parent=1 // pred_check_branch
      %44 = sbr.rel (0) target = $region25
    $region24: #{tpu_custom_call.1} parent=1 // pred_region
      %45 = dma.done [#allocation3], 384
    $region25: #{tpu_custom_call.1} parent=1 // pred_fallthru
      _
    // Predicated region
    $region26: #{tpu_custom_call.1} parent=1 // pred_check
      _
    $region27: #{tpu_custom_call.1} parent=1 // pred_check_branch
      %47 = sbr.rel (0) target = $region29
    $region28: #{tpu_custom_call.1} parent=1 // pred_region
      %48 = dma.done [#allocation6], 2304
    $region29: #{tpu_custom_call.1} parent=1 // pred_fallthru
      _
    %v50 = vld [vmem:[#allocation2] sm:$0xff]
    %v51 = vld [vmem:[#allocation2 + $0x8] sm:$0xf]
    %v52 = vld [vmem:[#allocation2 + $0xc] sm:$0xff]
    %v53 = vld [vmem:[#allocation2 + $0x14] sm:$0xf]
    %v54 = vld [vmem:[#allocation5] sm:$0xf]
    %v55 = vld [vmem:[#allocation5 + $0x4] sm:$0xf]
    %v56 = vld [vmem:[#allocation5 + $0x8] sm:$0xf]
    %v57 = vld [vmem:[#allocation5 + $0xc] sm:$0xf]
    %v58 = vld [vmem:[#allocation5 + $0x10] sm:$0xf]
    %v59 = vld [vmem:[#allocation5 + $0x14] sm:$0xf]
    %v60 = vld [vmem:[#allocation5 + $0x18] sm:$0xf]
    %v61 = vld [vmem:[#allocation5 + $0x1c] sm:$0xf]
    %v62 = vld [vmem:[#allocation5 + $0x20] sm:$0xf]
    %v63 = vld [vmem:[#allocation5 + $0x24] sm:$0xf]
    %v64 = vld [vmem:[#allocation5 + $0x28] sm:$0xf]
    %v65 = vld [vmem:[#allocation5 + $0x2c] sm:$0xf]
    %v66 = vld [vmem:[#allocation5 + $0x30] sm:$0xf]
    %v67 = vld [vmem:[#allocation5 + $0x34] sm:$0xf]
    %v68 = vld [vmem:[#allocation5 + $0x38] sm:$0xf]
    %v69 = vld [vmem:[#allocation5 + $0x3c] sm:$0xf]
    %v70 = vld [vmem:[#allocation5 + $0x40] sm:$0xf]
    %v71 = vld [vmem:[#allocation5 + $0x44] sm:$0xf]
    %v72 = vld [vmem:[#allocation5 + $0x48] sm:$0xf]
    %v73 = vld [vmem:[#allocation5 + $0x4c] sm:$0xf]
    %v74 = vld [vmem:[#allocation5 + $0x50] sm:$0xf]
    %v75 = vld [vmem:[#allocation5 + $0x54] sm:$0xf]
    %v76 = vld [vmem:[#allocation5 + $0x58] sm:$0xf]
    %v77 = vld [vmem:[#allocation5 + $0x5c] sm:$0xf]
    %v78 = vld [vmem:[#allocation5 + $0x60] sm:$0xf]
    %v79 = vld [vmem:[#allocation5 + $0x64] sm:$0xf]
    %v80 = vld [vmem:[#allocation5 + $0x68] sm:$0xf]
    %v81 = vld [vmem:[#allocation5 + $0x6c] sm:$0xf]
    %v82 = vld [vmem:[#allocation5 + $0x70] sm:$0xf]
    %v83 = vld [vmem:[#allocation5 + $0x74] sm:$0xf]
    %v84 = vld [vmem:[#allocation5 + $0x78] sm:$0xf]
    %v85 = vld [vmem:[#allocation5 + $0x7c] sm:$0xf]
    %v86 = vld [vmem:[#allocation5 + $0x80] sm:$0xf]
    %v87 = vld [vmem:[#allocation5 + $0x84] sm:$0xf]
    %v88 = vld [vmem:[#allocation5 + $0x88] sm:$0xf]
    %v89 = vld [vmem:[#allocation5 + $0x8c] sm:$0xf]
    %v94 = vunpack.c.l.b16 %v50
    %v95 = vunpack.c.h.b16 %v50
    %v96 = vunpack.c.l.b16 %v51
    %v97 = vunpack.c.l.b16 %v52
    %v98 = vunpack.c.h.b16 %v52
    %v99 = vunpack.c.l.b16 %v53
    %v100 = vpack.c.b16 %v97, %v94
    %v101 = vpack.c.b16 %v98, %v95
    %v102 = vpack.c.b16 %v99, %v96
    %v141 = vunpack.c.l.b16 %v54
    %v142 = vunpack.c.l.b16 %v55
    %v143 = vunpack.c.l.b16 %v56
    %v144 = vunpack.c.l.b16 %v57
    %v145 = vunpack.c.l.b16 %v58
    %v146 = vunpack.c.l.b16 %v59
    %v147 = vunpack.c.l.b16 %v60
    %v148 = vunpack.c.l.b16 %v61
    %v149 = vunpack.c.l.b16 %v62
    %v150 = vunpack.c.l.b16 %v63
    %v151 = vunpack.c.l.b16 %v64
    %v152 = vunpack.c.l.b16 %v65
    %v153 = vunpack.c.l.b16 %v66
    %v154 = vunpack.c.l.b16 %v67
    %v155 = vunpack.c.l.b16 %v68
    %v156 = vunpack.c.l.b16 %v69
    %v157 = vunpack.c.l.b16 %v70
    %v158 = vunpack.c.l.b16 %v71
    %v159 = vunpack.c.l.b16 %v72
    %v160 = vunpack.c.l.b16 %v73
    %v161 = vunpack.c.l.b16 %v74
    %v162 = vunpack.c.l.b16 %v75
    %v163 = vunpack.c.l.b16 %v76
    %v164 = vunpack.c.l.b16 %v77
    %v165 = vunpack.c.l.b16 %v78
    %v166 = vunpack.c.l.b16 %v79
    %v167 = vunpack.c.l.b16 %v80
    %v168 = vunpack.c.l.b16 %v81
    %v169 = vunpack.c.l.b16 %v82
    %v170 = vunpack.c.l.b16 %v83
    %v171 = vunpack.c.l.b16 %v84
    %v172 = vunpack.c.l.b16 %v85
    %v173 = vunpack.c.l.b16 %v86
    %v174 = vunpack.c.l.b16 %v87
    %v175 = vunpack.c.l.b16 %v88
    %v176 = vunpack.c.l.b16 %v89
    %v177 = vpack.c.b16 %v142, %v141
    %v178 = vpack.c.b16 %v144, %v143
    %v179 = vpack.c.b16 %v146, %v145
    %v180 = vpack.c.b16 %v148, %v147
    %v181 = vpack.c.b16 %v150, %v149
    %v182 = vpack.c.b16 %v152, %v151
    %v183 = vpack.c.b16 %v154, %v153
    %v184 = vpack.c.b16 %v156, %v155
    %v185 = vpack.c.b16 %v158, %v157
    %v186 = vpack.c.b16 %v160, %v159
    %v187 = vpack.c.b16 %v162, %v161
    %v188 = vpack.c.b16 %v164, %v163
    %v189 = vpack.c.b16 %v166, %v165
    %v190 = vpack.c.b16 %v168, %v167
    %v191 = vpack.c.b16 %v170, %v169
    %v192 = vpack.c.b16 %v172, %v171
    %v193 = vpack.c.b16 %v174, %v173
    %v194 = vpack.c.b16 %v176, %v175
    %vm213 = vcmask 261120
    %v215 = vsel %vm213, %v102, 0
    %217 = vmatprep.subr.bf16.mxu0 0
    %218 = vmatpush1.bf16.msra.mxu0 %v184
    %219 = vmatprep.subr.bf16.mxu0 0
    %220 = vmatpush1.bf16.msra.mxu0 %v183
    %221 = vmatprep.subr.bf16.mxu0 0
    %222 = vmatpush1.bf16.msra.mxu0 %v182
    %223 = vmatprep.subr.bf16.mxu0 0
    %224 = vmatpush1.bf16.msra.mxu0 %v181
    %225 = vmatprep.subr.bf16.mxu0 0
    %226 = vmatpush1.bf16.msra.mxu0 %v180
    %227 = vmatprep.subr.bf16.mxu0 0
    %228 = vmatpush1.bf16.msra.mxu0 %v179
    %229 = vmatprep.subr.bf16.mxu0 0
    %230 = vmatpush1.bf16.msra.mxu0 %v178
    %231 = vmatprep.subr.bf16.mxu0 0
    %232 = vmatpush1.bf16.msra.mxu0 %v177
    %233 = vmatprep.subr.bf16.mxu0 0
    %234 = vmatpush2.bf16.msra.mxu0 %v192
    %235 = vmatprep.subr.bf16.mxu0 0
    %236 = vmatpush2.bf16.msra.mxu0 %v191
    %237 = vmatprep.subr.bf16.mxu0 0
    %238 = vmatpush2.bf16.msra.mxu0 %v190
    %239 = vmatprep.subr.bf16.mxu0 0
    %240 = vmatpush2.bf16.msra.mxu0 %v189
    %241 = vmatprep.subr.bf16.mxu0 0
    %242 = vmatpush2.bf16.msra.mxu0 %v188
    %243 = vmatprep.subr.bf16.mxu0 0
    %244 = vmatpush2.bf16.msra.mxu0 %v187
    %245 = vmatprep.subr.bf16.mxu0 0
    %246 = vmatpush2.bf16.msra.mxu0 %v186
    %247 = vmatprep.subr.bf16.mxu0 0
    %248 = vmatpush2.bf16.msra.mxu0 %v185
    %249 = vmatprep.mubr.bf16.mxu0 %v101
    %250 = vmatmul.mubr.bf16.gmra.mxu0 %v100
    %v251 = vpop.f32.mrf.mxu0
    %v252 = vadd.f32 0.0, %v251
    %v253 = vpop.f32.mrf.mxu0
    %v254 = vpop.f32.mrf.mxu0
    %v255 = vadd.f32 0.0, %v254
    %v256 = vpop.f32.mrf.mxu0
    %257 = vdwg.mxu0
    %258 = vmatprep.subr.bf16.mxu0 0
    %259 = vmatpush1.bf16.msra.mxu0 0
    %260 = vmatprep.subr.bf16.mxu0 0
    %261 = vmatpush1.bf16.msra.mxu0 0
    %262 = vmatprep.subr.bf16.mxu0 0
    %263 = vmatpush1.bf16.msra.mxu0 0
    %264 = vmatprep.subr.bf16.mxu0 0
    %265 = vmatpush1.bf16.msra.mxu0 0
    %266 = vmatprep.subr.bf16.mxu0 0
    %267 = vmatpush1.bf16.msra.mxu0 0
    %268 = vmatprep.subr.bf16.mxu0 0
    %269 = vmatpush1.bf16.msra.mxu0 0
    %270 = vmatprep.subr.bf16.mxu0 0
    %271 = vmatpush1.bf16.msra.mxu0 %v194
    %272 = vmatprep.subr.bf16.mxu0 0
    %273 = vmatpush1.bf16.msra.mxu0 %v193
    %274 = vmatprep.subr.bf16.mxu0 0
    %275 = vmatpush2.bf16.msra.mxu0 0
    %276 = vmatprep.subr.bf16.mxu0 0
    %277 = vmatpush2.bf16.msra.mxu0 0
    %278 = vmatprep.subr.bf16.mxu0 0
    %279 = vmatpush2.bf16.msra.mxu0 0
    %280 = vmatprep.subr.bf16.mxu0 0
    %281 = vmatpush2.bf16.msra.mxu0 0
    %282 = vmatprep.subr.bf16.mxu0 0
    %283 = vmatpush2.bf16.msra.mxu0 0
    %284 = vmatprep.subr.bf16.mxu0 0
    %285 = vmatpush2.bf16.msra.mxu0 0
    %286 = vmatprep.subr.bf16.mxu0 0
    %287 = vmatpush2.bf16.msra.mxu0 0
    %288 = vmatprep.subr.bf16.mxu0 0
    %289 = vmatpush2.bf16.msra.mxu0 0
    %290 = vmatprep.mubr.bf16.mxu0 0
    %291 = vmatmul.mubr.bf16.gmra.mxu0 %v215
    %v292 = vpop.f32.mrf.mxu0
    %v293 = vadd.f32 %v252, %v292
    %v294 = vpop.f32.mrf.mxu0
    %v295 = vpop.f32.mrf.mxu0
    %v296 = vadd.f32 %v255, %v295
    %v297 = vpop.f32.mrf.mxu0
    %298 = vdwg.mxu0
    %v299 = vld [vmem:[%s2] sm:$0x1]
    %v301 = vlaneseq
    %v302 = vshrl.u32 %v301, 7
    %v303 = vsub.s32 0, %v302
    %v304 = vrot.slane %v299, %v303
    %v306 = vmul.f32 %v293, %v304
    %v307 = vmul.f32 %v296, %v304
    %v308 = vld [vmem:[%s3] sm:$0x1]
    %v310 = vlaneseq
    %v311 = vshrl.u32 %v310, 7
    %v312 = vsub.s32 0, %v311
    %v313 = vrot.slane %v308, %v312
    %v315 = vadd.f32 %v306, %v313
    %v316 = vadd.f32 %v307, %v313
    %v317 = vld [vmem:[%s4] sm:$0x1]
    %vm318 = vcmp.gt.f32.partialorder %v317, 0.5
    %v319 = vmax.f32 %v315, 0.0
    %v320 = vmax.f32 %v316, 0.0
    %v321 = vsel %vm318, 1, 0
    %v322 = vlaneseq
    %v323 = vshrl.u32 %v322, 7
    %v324 = vsub.s32 0, %v323
    %v325 = vrot.slane %v321, %v324
    %vm326 = vcmp.eq.s32.totalorder %v325, 1
    %v327 = vsel %vm326, %v319, %v315
    %v328 = vsel %vm326, %v320, %v316
    %329 = vst [vmem:[#allocation7] sm:$0xff] %v327
    %330 = vst [vmem:[#allocation7 + $0x8] sm:$0xff] %v328
    // Predicated region
    $region30: #{tpu_custom_call.1} parent=1 // pred_check
      _
    $region31: #{tpu_custom_call.1} parent=1 // pred_check_branch
      %332 = sbr.rel (0) target = $region33
    $region32: #{tpu_custom_call.1} parent=1 // pred_region
      %s334 = ssub.s32 256, 256
      %335 = vsyncadd [#allocation4], %s334
      %s336 = sshll.u32 [#allocation7], 4
      %s337 = int_to_ptr.vmem [resolvable:$true] %s336
      %342 = dma.vmem_to_hbm [thread:$0]  %s337, 256, %s5, [#allocation4], 128, 128, 8
    $region33: #{tpu_custom_call.1} parent=1 // pred_fallthru
      _
    // Predicated region
    $region34: #{tpu_custom_call.1} parent=1 // pred_check
      _
    $region35: #{tpu_custom_call.1} parent=1 // pred_check_branch
      %344 = sbr.rel (0) target = $region37
    $region36: #{tpu_custom_call.1} parent=1 // pred_region
      %345 = dma.done [#allocation4], 256
    $region37: #{tpu_custom_call.1} parent=1 // pred_fallthru
      _
    %346 = vsyncpa [#allocation3], 1
    %347 = vsyncpa [#allocation6], 1
    %348 = vsyncpa [#allocation4], 1

</llo_original>
